<compile_context>
chip_gen: v5e
topology: v5e:2x2
jax: 0.10.0
libtpu: 0.0.40
codegen_flags: <defaults>
</compile_context>

<pallas_src>
import math
from functools import partial

import jax
import jax.numpy as jnp
from jax.experimental import pallas as pl
from jax.experimental.pallas import tpu as pltpu


# --------------------------- VMEM budgeting ----------------------------------

def _vmem_budget_bytes():
    """Per-generation VMEM budget for block sizing (v5e/v6e 128 MiB, v7x 64 MiB)."""
    cap = 64 * 1024 * 1024                      # conservative default (v7x physical)
    try:
        info = pltpu.get_tpu_info()
        cap = int(getattr(info, "vmem_capacity_bytes", cap)) or cap
    except Exception:
        pass
    # ~40% of physical for streamed blocks + resident constants, sane cap.
    return max(8 * 1024 * 1024, min(int(cap * 0.4), 48 * 1024 * 1024))


def _pick_batch_block(n, per_img_bytes, resident_bytes, budget):
    """Largest divisor nb of n whose blocks fit the budget, keeping >=2 grid
    steps when n >= 2 so megacore / pipelining has independent work."""
    max_nb = n if n < 2 else max(n // 2, 1)
    for cand in range(max_nb, 0, -1):
        if n % cand == 0 and resident_bytes + cand * per_img_bytes <= budget:
            return cand
    return 1


# --------------------------- Pallas kernels ----------------------------------

def _conv1x1_kernel(w_ref, b_ref, x_ref, o_ref):
    # w_ref: (C,) SMEM, b_ref: (1, 1) SMEM
    # x_ref: (nb, C, H, W) VMEM (natural NCHW block), o_ref: (nb, 1, H, W) VMEM
    xb = x_ref[...]
    c_in = xb.shape[1]
    # small-C channel contraction: unrolled VPU broadcast-MACs (no MXU push/pop,
    # no layout transposes, dense natural-layout stores)
    acc = xb[:, 0:1, :, :] * w_ref[0]
    for c in range(1, c_in):
        acc = acc + xb[:, c:c + 1, :, :] * w_ref[c]
    o_ref[...] = (acc + b_ref[0, 0]).astype(o_ref.dtype)


def _balancer_loss_kernel(w_ref, b_ref, x_ref, ah_ref, awt_ref, t_ref,
                          part_ref, acc_ref):
    # Grid = (P, inner).  P: "parallel" axis -> per-core partial SSE outputs
    # (acc_ref is per-core VMEM).  inner: "arbitrary" accumulator-carry axis.
    i = pl.program_id(1)

    @pl.when(i == 0)
    def _():
        acc_ref[...] = jnp.zeros_like(acc_ref)

    nb, c_in = x_ref.shape[0], x_ref.shape[1]
    bias = b_ref[0, 0]
    ah = ah_ref[...]          # (Ht, H)  H-resize
    awt = awt_ref[...]        # (W, Wt)  W-resize (transposed)

    for j in range(nb):                        # static unroll; nb kept small
        xj = x_ref[j]                          # (C, H, W)
        # 1x1 conv: unrolled VPU broadcast-MACs over channels
        y = xj[0] * w_ref[0]
        for c in range(1, c_in):
            y = y + xj[c] * w_ref[c]
        # un-fused bilinear resize: two small per-image MXU matmuls
        u = jnp.dot(ah, y, preferred_element_type=jnp.float32)    # (Ht, W)
        z = jnp.dot(u, awt, preferred_element_type=jnp.float32)   # (Ht, Wt)
        # conv bias commutes through both row-stochastic resizes
        d = (z + bias) - t_ref[j]
        acc_ref[...] += d * d                  # vector accumulator (VPU only)

    @pl.when(i == pl.num_programs(1) - 1)
    def _():
        # one cross-lane reduce per parallel slice, only at the end
        part_ref[...] = jnp.sum(acc_ref[...], axis=(0, 1), keepdims=True)


# --------------------------- wrappers -----------------------------------------

def _bilinear_matrix(out_size, in_size):
    """Row-stochastic (out_size, in_size) matrix reproducing PyTorch bilinear
    interpolation with align_corners=False along one axis."""
    scale = in_size / out_size
    rows = []
    for i in range(out_size):
        src = max((i + 0.5) * scale - 0.5, 0.0)
        i0 = min(int(math.floor(src)), in_size - 1)
        i1 = min(i0 + 1, in_size - 1)
        frac = src - i0
        row = [0.0] * in_size
        row[i0] += 1.0 - frac
        row[i1] += frac
        rows.append(row)
    return jnp.array(rows, dtype=jnp.float32)


def _conv_forward(w, b, x, *, budget):
    n, c_in, h, wid = x.shape
    # x block + out block, double-buffered
    per_img = 4 * (c_in * h * wid + h * wid) * 2
    nb = _pick_batch_block(n, per_img, 1 << 20, budget)

    return pl.pallas_call(
        _conv1x1_kernel,
        out_shape=jax.ShapeDtypeStruct((n, 1, h, wid), jnp.float32),
        grid_spec=pltpu.PrefetchScalarGridSpec(
            num_scalar_prefetch=0,
            grid=(n // nb,),
            in_specs=[
                pl.BlockSpec(memory_space=pltpu.MemorySpace.SMEM),        # w (C,)
                pl.BlockSpec(memory_space=pltpu.MemorySpace.SMEM),        # b (1,1)
                pl.BlockSpec((nb, c_in, h, wid), lambda i: (i, 0, 0, 0)),  # NCHW block
            ],
            out_specs=pl.BlockSpec((nb, 1, h, wid), lambda i: (i, 0, 0, 0)),
        ),
        compiler_params=pltpu.CompilerParams(
            dimension_semantics=("parallel",),
            vmem_limit_bytes=int(budget)),
    )(w, b, x)


def _loss_forward(w, b, x, t, *, budget, coeff):
    n, c_in, h, wid = x.shape
    ht, wt = t.shape[1], t.shape[2]

    ah = _bilinear_matrix(ht, h)               # (Ht, H)
    awt = _bilinear_matrix(wt, wid).T          # (W, Wt)

    # streamed x + target blocks (double-buffered) + resident resize mats + acc
    per_img = 4 * (c_in * h * wid + ht * wt) * 2
    resident = 4 * (ht * h + wid * wt) * 2 + 4 * ht * wt + (1 << 20)
    nb = _pick_batch_block(n, per_img, resident, budget)

    nblocks = n // nb
    p_split = 2 if nblocks % 2 == 0 else 1     # feed both v7x TensorCores
    inner = nblocks // p_split

    partials = pl.pallas_call(
        _balancer_loss_kernel,
        out_shape=jax.ShapeDtypeStruct((p_split, 1, 1), jnp.float32),
        grid_spec=pltpu.PrefetchScalarGridSpec(
            num_scalar_prefetch=0,
            grid=(p_split, inner),
            in_specs=[
                pl.BlockSpec(memory_space=pltpu.MemorySpace.SMEM),        # w (C,)
                pl.BlockSpec(memory_space=pltpu.MemorySpace.SMEM),        # b (1,1)
                pl.BlockSpec((nb, c_in, h, wid),
                             lambda p, i: (p * inner + i, 0, 0, 0)),       # NCHW block
                pl.BlockSpec((ht, h), lambda p, i: (0, 0)),                # H-resize
                pl.BlockSpec((wid, wt), lambda p, i: (0, 0)),              # W-resize^T
                pl.BlockSpec((nb, ht, wt),
                             lambda p, i: (p * inner + i, 0, 0)),          # targets
            ],
            out_specs=pl.BlockSpec((None, 1, 1), lambda p, i: (p, 0, 0)),
            scratch_shapes=[pltpu.VMEM((ht, wt), jnp.float32)],            # per-core acc
        ),
        compiler_params=pltpu.CompilerParams(
            # leading axis splits batch blocks across cores (per-core accumulator
            # + per-core partial output); inner axis carries the accumulator and
            # must stay 'arbitrary'.
            dimension_semantics=("parallel", "arbitrary"),
            vmem_limit_bytes=int(budget)),
    )(w, b, x, ah, awt, t)

    # tiny epilogue: sum per-core partials, then loss_coeff * mean()
    # (single head => torch.stack(losses).mean() is the identity)
    return (coeff / float(n * ht * wt)) * jnp.sum(partials)


class BalancerPallas:
    """Pallas port of Balancer(model=Conv2d(C,1,1), crits=MSELoss, loss_coeffs=[c])."""

    def __init__(self, c_in, loss_coeff=0.5, key=None):
        if key is None:
            key = jax.random.PRNGKey(0)
        kw, kb = jax.random.split(key)
        # Conv2d(c_in, 1, kernel_size=1): per-channel scalars, read from SMEM in-kernel.
        self.w = jax.random.normal(kw, (c_in,), jnp.float32) / math.sqrt(c_in)
        self.b = jax.random.normal(kb, (1, 1), jnp.float32) * 0.1
        self.loss_coeff = float(loss_coeff)

        budget = _vmem_budget_bytes()
        # jit-wrap both paths: constant construction / block picking traced once.
        self._model_fn = jax.jit(partial(_conv_forward, budget=budget))
        self._loss_fn = jax.jit(partial(_loss_forward, budget=budget,
                                        coeff=self.loss_coeff))
        # TODO(synk): opt.zero_grad() / loss.backward() / opt.step() are training-time
        # side effects with no forward-kernel equivalent; only forward + loss is ported.

    def __call__(self, inp, targets=None):
        if targets is None:
            return self._model_fn(self.w, self.b, inp)
        return self._loss_fn(self.w, self.b, inp, targets)


# --------------------------- reference (plain JAX) ----------------------------

def _reference_outputs(w, b, x):
    return (jnp.einsum('nchw,c->nhw', x, w) + b[0, 0])[:, None]


def _reference_loss(w, b, coeff, x, t):
    ht, wt = t.shape[1], t.shape[2]
    y = jnp.einsum('nchw,c->nhw', x, w) + b[0, 0]                # (N, H, W)
    ah = _bilinear_matrix(ht, x.shape[2])
    aw = _bilinear_matrix(wt, x.shape[3])
    z = jnp.einsum('oh,nhw,pw->nop', ah, y, aw)                  # (N, Ht, Wt)
    return coeff * jnp.mean((z - t) ** 2)


if __name__ == "__main__":
    key = jax.random.PRNGKey(0)
    k1, k2, k3 = jax.random.split(key, 3)

    N, C, H, W = 2, 4, 16, 16
    HT, WT = 32, 32

    x = jax.random.normal(k1, (N, C, H, W), jnp.float32)
    targets = jax.random.normal(k2, (N, HT, WT), jnp.float32)

    balancer = BalancerPallas(c_in=C, loss_coeff=0.5, key=k3)

    # targets=None path: returns model outputs (N, 1, H, W)
    out = jax.block_until_ready(balancer(x))
    assert out.shape == (N, 1, H, W)
    ref_out = _reference_outputs(balancer.w, balancer.b, x)
    assert jnp.allclose(out, ref_out, atol=1e-3, rtol=1e-3)

    # targets path: returns the weighted mean loss (scalar)
    loss = jax.block_until_ready(balancer(x, targets))
    ref = _reference_loss(balancer.w, balancer.b, balancer.loss_coeff, x, targets)
    assert jnp.allclose(loss, ref, atol=1e-3, rtol=1e-3), (loss, ref)

    print("KERNEL_OK")
</pallas_src>

<mosaic_0001>
module attributes {stable_mosaic.version = 11 : i64} {
  func.func @_conv1x1_kernel(%arg0: i32, %arg1: memref<4xf32, #tpu.memory_space<smem>>, %arg2: memref<1x1xf32, #tpu.memory_space<smem>>, %arg3: memref<1x4x16x16xf32, #tpu.memory_space<vmem>>, %arg4: memref<1x1x16x16xf32, #tpu.memory_space<vmem>>) attributes {dimension_semantics = [#tpu.dimension_semantics<parallel>], iteration_bounds = array<i64: 2>, scalar_prefetch = 0 : i64, scratch_operands = 0 : i64, tpu.core_type = #tpu.core_type<tc>, window_params = [{transform_indices = @transform_0, window_bounds = array<i64: 4>}, {transform_indices = @transform_1, window_bounds = array<i64: 1, 1>}, {transform_indices = @transform_2, window_bounds = array<i64: 1, 4, 16, 16>}, {transform_indices = @transform_3, window_bounds = array<i64: 1, 1, 16, 16>}]} {
    %c0 = arith.constant 0 : index
    %c0_0 = arith.constant 0 : index
    %c0_1 = arith.constant 0 : index
    %c0_2 = arith.constant 0 : index
    %0 = vector.load %arg3[%c0, %c0_0, %c0_1, %c0_2] : memref<1x4x16x16xf32, #tpu.memory_space<vmem>>, vector<1x4x16x16xf32>
    %1 = vector.extract_strided_slice %0 {offsets = [0, 0, 0, 0], sizes = [1, 1, 16, 16], strides = [1, 1, 1, 1]} : vector<1x4x16x16xf32> to vector<1x1x16x16xf32>
    %c0_3 = arith.constant 0 : index
    %2 = memref.load %arg1[%c0_3] : memref<4xf32, #tpu.memory_space<smem>>
    %3 = vector.broadcast %2 : f32 to vector<1x1x16x16xf32>
    %4 = arith.mulf %1, %3 : vector<1x1x16x16xf32>
    %5 = vector.extract_strided_slice %0 {offsets = [0, 1, 0, 0], sizes = [1, 1, 16, 16], strides = [1, 1, 1, 1]} : vector<1x4x16x16xf32> to vector<1x1x16x16xf32>
    %c1 = arith.constant 1 : index
    %6 = memref.load %arg1[%c1] : memref<4xf32, #tpu.memory_space<smem>>
    %7 = vector.broadcast %6 : f32 to vector<1x1x16x16xf32>
    %8 = arith.mulf %5, %7 : vector<1x1x16x16xf32>
    %9 = arith.addf %4, %8 : vector<1x1x16x16xf32>
    %10 = vector.extract_strided_slice %0 {offsets = [0, 2, 0, 0], sizes = [1, 1, 16, 16], strides = [1, 1, 1, 1]} : vector<1x4x16x16xf32> to vector<1x1x16x16xf32>
    %c2 = arith.constant 2 : index
    %11 = memref.load %arg1[%c2] : memref<4xf32, #tpu.memory_space<smem>>
    %12 = vector.broadcast %11 : f32 to vector<1x1x16x16xf32>
    %13 = arith.mulf %10, %12 : vector<1x1x16x16xf32>
    %14 = arith.addf %9, %13 : vector<1x1x16x16xf32>
    %15 = vector.extract_strided_slice %0 {offsets = [0, 3, 0, 0], sizes = [1, 1, 16, 16], strides = [1, 1, 1, 1]} : vector<1x4x16x16xf32> to vector<1x1x16x16xf32>
    %c3 = arith.constant 3 : index
    %16 = memref.load %arg1[%c3] : memref<4xf32, #tpu.memory_space<smem>>
    %17 = vector.broadcast %16 : f32 to vector<1x1x16x16xf32>
    %18 = arith.mulf %15, %17 : vector<1x1x16x16xf32>
    %19 = arith.addf %14, %18 : vector<1x1x16x16xf32>
    %c0_4 = arith.constant 0 : index
    %c0_5 = arith.constant 0 : index
    %20 = memref.load %arg2[%c0_4, %c0_5] : memref<1x1xf32, #tpu.memory_space<smem>>
    %21 = vector.broadcast %20 : f32 to vector<1x1x16x16xf32>
    %22 = arith.addf %19, %21 : vector<1x1x16x16xf32>
    %c0_6 = arith.constant 0 : index
    %c0_7 = arith.constant 0 : index
    %c0_8 = arith.constant 0 : index
    %c0_9 = arith.constant 0 : index
    %23 = vector.load %arg4[%c0_6, %c0_7, %c0_8, %c0_9] : memref<1x1x16x16xf32, #tpu.memory_space<vmem>>, vector<1x1x16x16xf32>
    tpu.vector_store %arg4[%c0_6, %c0_7, %c0_8, %c0_9], %22 {strides = array<i32>} : memref<1x1x16x16xf32, #tpu.memory_space<vmem>>, vector<1x1x16x16xf32>,
    return
  }
  func.func @transform_0(%arg0: i32) -> i32 {
    %c0_i32 = arith.constant 0 : i32
    %c0_i32_0 = arith.constant 0 : i32
    return %c0_i32 : i32
  }
  func.func @transform_1(%arg0: i32) -> (i32, i32) {
    %c0_i32 = arith.constant 0 : i32
    %c0_i32_0 = arith.constant 0 : i32
    %c0_i32_1 = arith.constant 0 : i32
    return %c0_i32, %c0_i32_0 : i32, i32
  }
  func.func @transform_2(%arg0: i32) -> (i32, i32, i32, i32) {
    %c0_i32 = arith.constant 0 : i32
    %c0_i32_0 = arith.constant 0 : i32
    %c0_i32_1 = arith.constant 0 : i32
    %c0_i32_2 = arith.constant 0 : i32
    return %arg0, %c0_i32, %c0_i32_0, %c0_i32_1 : i32, i32, i32, i32
  }
  func.func @transform_3(%arg0: i32) -> (i32, i32, i32, i32) {
    %c0_i32 = arith.constant 0 : i32
    %c0_i32_0 = arith.constant 0 : i32
    %c0_i32_1 = arith.constant 0 : i32
    %c0_i32_2 = arith.constant 0 : i32
    return %arg0, %c0_i32, %c0_i32_0, %c0_i32_1 : i32, i32, i32, i32
  }
}

</mosaic_0001>

<llo_original>
// kernel: _conv_forward.1
$region0: #{_conv_forward.1}
  #allocation0 [shape = 'u32[]', space=smem, size = 0x4, offset = 0x4, fixed_abs, tag = 'smem constant byte address 0x4 - core index']
  #allocation1 [shape = 'u32[72,128]{1,0:T(1,128)}', space=vmem, size = 0x9000, scoped, tag = 'internal scratch']
  #allocation2 [shape = 'f32[1,1]{1,0:T(1,128)S(6)}', space=smem, size = 0x200, scoped, tag = 'scoped memory for _conv_forward.1']
  %s0 = inlined_call_operand.vmem [shape: f32[4], index: 0, kind: input, shape index: {}]
  %s1 = inlined_call_operand.<no memory space> [shape: f32[1,1], index: 1, kind: input, shape index: {}]
  %s2 = inlined_call_operand.hbm [shape: f32[2,4,16,16], index: 2, kind: input, shape index: {}]
  %s3 = inlined_call_operand.hbm [shape: f32[2,1,16,16], index: 3, kind: output, shape index: {}]
  %s4 = sld [smem:[#allocation0]]
  $region53: #{_conv_forward.1} parent=0
    _
  %s6 = ssub.s32 1, %s4
  %s7 = scalar_select 0, %s6, %s4
  %8 = sst [smem:[#allocation2]] %s1
  $region1: #{_conv_forward.1} parent=0
    #allocation3 [shape = 'u8[512]{0}', space=smem, size = 0x200, scoped, tag = 'input window, operand 0, single buffered']
    #allocation4 [shape = 's32[2]{0}', space=sflag, size = 0x8, scoped, tag = 'scoped memory for _conv_forward.1']
    #allocation5 [shape = 's32[2]{0}', space=sflag, size = 0x8, scoped, tag = 'scoped memory for _conv_forward.1']
    #allocation6 [shape = 's32[2]{0}', space=sflag, size = 0x8, scoped, tag = 'scoped memory for _conv_forward.1']
    #allocation7 [shape = 'u8[65536]{0}', space=vmem, size = 0x10000, scoped, tag = 'input window, operand 2']
    #allocation8 [shape = 'u8[16384]{0}', space=vmem, size = 0x4000, scoped, tag = 'output window, operand 0']
    %9 = vsyncpa [#allocation6], 0
    %10 = vsyncpa [#allocation4], 0
    %s11 = scalar_lea.sflag [#allocation4], 1
    %12 = vsyncpa %s11, 0
    %13 = vsyncpa [#allocation5], 0
    %s14 = scalar_lea.sflag [#allocation5], 1
    %15 = vsyncpa %s14, 0
    loop: start=0, step=1, limit=4
    $region2: #{_conv_forward.1} parent=1 // loop_pre_header
      _
    $region3: #{_conv_forward.1} parent=1 // loop_header
      %s17 = sphi 0, %s21
      %p18 = scmp.ge.s32.totalorder %s17, 4
      %s25 = sphi 0, %s25
      %s27 = sphi 0, %s25
      %s28 = sphi 0, %s27
      %s42 = sphi 0, %s28
      %s46 = sphi 0, %s46
      %s48 = sphi 0, %s46
      %s49 = sphi 0, %s48
      %s63 = sphi 0, %s49
      %s69 = sphi 0, %s71
      %s72 = sphi 0, %s69
      %s73 = sphi 0, %s72
      %s89 = sphi 0, %s73
      %s95 = sphi 0, %s97
      %s98 = sphi 0, %s95
      %s99 = sphi 0, %s98
      %s115 = sphi 0, %s99
    $region4: #{_conv_forward.1} parent=1 // loop_header_branch
      %20 = sbr.rel (%p18) target = $region8
    $region5: #{_conv_forward.1} parent=1 // loop_body
      %s22 = ssub.s32 %s17, 1
      %s23 = ssub.s32 %s17, 2
      %s24 = sadd.s32 %s17, 1
      %s26 = sadd.s32 %s25, 1
      %p29 = scmp.eq.s32.totalorder %s17, 1
      %p30 = scmp.ne.s32.totalorder %s25, %s27
      %p31 = scmp.eq.s32.totalorder %s17, 0
      %p32 = por %p30, %p31
      %p33 = scmp.ne.s32.totalorder %s25, %s27
      %p34 = scmp.eq.s32.totalorder %s22, 1
      %p35 = por %p33, %p34
      %p36 = scmp.ne.s32.totalorder %s27, %s28
      %p37 = scmp.eq.s32.totalorder %s22, 0
      %p38 = por %p36, %p37
      %p39 = scmp.ne.s32.totalorder %s27, %s28
      %p40 = scmp.eq.s32.totalorder %s23, 1
      %p41 = por %p39, %p40
      %p43 = scmp.ne.s32.totalorder %s28, %s42
      %p44 = scmp.eq.s32.totalorder %s23, 0
      %p45 = por %p43, %p44
      %s47 = sadd.s32 %s46, 1
      %p50 = scmp.eq.s32.totalorder %s17, 1
      %p51 = scmp.ne.s32.totalorder %s46, %s48
      %p52 = scmp.eq.s32.totalorder %s17, 0
      %p53 = por %p51, %p52
      %p54 = scmp.ne.s32.totalorder %s46, %s48
      %p55 = scmp.eq.s32.totalorder %s22, 1
      %p56 = por %p54, %p55
      %p57 = scmp.ne.s32.totalorder %s48, %s49
      %p58 = scmp.eq.s32.totalorder %s22, 0
      %p59 = por %p57, %p58
      %p60 = scmp.ne.s32.totalorder %s48, %s49
      %p61 = scmp.eq.s32.totalorder %s23, 1
      %p62 = por %p60, %p61
      %p64 = scmp.ne.s32.totalorder %s49, %s63
      %p65 = scmp.eq.s32.totalorder %s23, 0
      %p66 = por %p64, %p65
      %s67 = ssub.s32 %s17, %s24
      %p68 = scmp.eq.s32.totalorder %s67, 0
      %s70 = sadd.s32 %s69, 1
      %s71 = scalar_select %p68, %s69, %s70
      %p74 = pneg %p68
      %p75 = scmp.eq.s32.totalorder %s17, 1
      %p76 = por %p74, %p75
      %p77 = scmp.ne.s32.totalorder %s69, %s72
      %p78 = scmp.eq.s32.totalorder %s17, 0
      %p79 = por %p77, %p78
      %p80 = scmp.ne.s32.totalorder %s69, %s72
      %p81 = scmp.eq.s32.totalorder %s22, 1
      %p82 = por %p80, %p81
      %p83 = scmp.ne.s32.totalorder %s72, %s73
      %p84 = scmp.eq.s32.totalorder %s22, 0
      %p85 = por %p83, %p84
      %p86 = scmp.ne.s32.totalorder %s72, %s73
      %p87 = scmp.eq.s32.totalorder %s23, 1
      %p88 = por %p86, %p87
      %p90 = scmp.ne.s32.totalorder %s73, %s89
      %p91 = scmp.eq.s32.totalorder %s23, 0
      %p92 = por %p90, %p91
      %s93 = ssub.s32 %s17, %s24
      %p94 = scmp.eq.s32.totalorder %s93, 0
      %s96 = sadd.s32 %s95, 1
      %s97 = scalar_select %p94, %s95, %s96
      %p100 = pneg %p94
      %p101 = scmp.eq.s32.totalorder %s17, 1
      %p102 = por %p100, %p101
      %p103 = scmp.ne.s32.totalorder %s95, %s98
      %p104 = scmp.eq.s32.totalorder %s17, 0
      %p105 = por %p103, %p104
      %p106 = scmp.ne.s32.totalorder %s95, %s98
      %p107 = scmp.eq.s32.totalorder %s22, 1
      %p108 = por %p106, %p107
      %p109 = scmp.ne.s32.totalorder %s98, %s99
      %p110 = scmp.eq.s32.totalorder %s22, 0
      %p111 = por %p109, %p110
      %p112 = scmp.ne.s32.totalorder %s98, %s99
      %p113 = scmp.eq.s32.totalorder %s23, 1
      %p114 = por %p112, %p113
      %p116 = scmp.ne.s32.totalorder %s99, %s115
      %p117 = scmp.eq.s32.totalorder %s23, 0
      %p118 = por %p116, %p117
      %p119 = scmp.le.s32.totalorder 1, %s17
      %p120 = scmp.lt.s32.totalorder %s17, 3
      %p121 = pnand %p119, %p120
      %p122 = pneg %p121
      // Predicated region
      $region9: #{_conv_forward.1} parent=5 // pred_check
        _
      $region10: #{_conv_forward.1} parent=5 // pred_check_branch
        %124 = sbr.rel (%p121) target = $region12
      $region11: #{_conv_forward.1} parent=5 // pred_region
        %s125 = ssub.s32 %s17, 1
        // Predicated region
        $region13: #{_conv_forward.1} parent=11 // pred_check
          %p126 = pneg %p38
        $region14: #{_conv_forward.1} parent=11 // pred_check_branch
          %128 = sbr.rel (%p126) target = $region16
        $region15: #{_conv_forward.1} parent=11 // pred_region
          %130 = vsyncadd [#allocation6], 0
          %s132 = sshll.u32 %s0, 4
          %s133 = int_to_ptr.vmem [resolvable:$true] %s132
          %135 = dma.vmem_to_smem %s133, 16, [#allocation3], [#allocation6]
        $region16: #{_conv_forward.1} parent=11 // pred_fallthru
          _
        // Predicated region
        $region17: #{_conv_forward.1} parent=11 // pred_check
          %p136 = pneg %p59
        $region18: #{_conv_forward.1} parent=11 // pred_check_branch
          %138 = sbr.rel (%p136) target = $region20
        $region19: #{_conv_forward.1} parent=11 // pred_region
          _
        $region20: #{_conv_forward.1} parent=11 // pred_fallthru
          _
      $region12: #{_conv_forward.1} parent=5 // pred_fallthru
        _
      %p139 = scmp.lt.s32.totalorder %s17, 2
      // Predicated region
      $region21: #{_conv_forward.1} parent=5 // pred_check
        %p140 = pneg %p139
      $region22: #{_conv_forward.1} parent=5 // pred_check_branch
        %142 = sbr.rel (%p140) target = $region24
      $region23: #{_conv_forward.1} parent=5 // pred_region
        // Predicated region
        $region25: #{_conv_forward.1} parent=23 // pred_check
          %p143 = pneg %p79
        $region26: #{_conv_forward.1} parent=23 // pred_check_branch
          %145 = sbr.rel (%p143) target = $region28
        $region27: #{_conv_forward.1} parent=23 // pred_region
          %s146 = sand.u32 %s69, 1
          %s147 = scalar_lea.sflag [#allocation4], %s146
          %s148 = sand.u32 %s69, 1
          %s149 = smul.addr %s148, 64
          %s150 = scalar_lea.vmem [#allocation7], %s149
          %152 = vsyncadd %s147, 0
          %s153 = smul.addr %s17, 8
          %s154 = smul.addr %s153, 8
          %s155 = scalar_lea.hbm %s2, %s154
          %s156 = sshll.u32 %s155, 4
          %s157 = int_to_ptr.hbm [resolvable:$true] %s156
          %s158 = sshll.u32 %s150, 4
          %s159 = int_to_ptr.vmem [resolvable:$true] %s158
          %164 = dma.hbm_to_vmem [thread:$0]  %s157, 1024, %s159, %s147, 128, 128, 8
        $region28: #{_conv_forward.1} parent=23 // pred_fallthru
          _
      $region24: #{_conv_forward.1} parent=5 // pred_fallthru
        _
      %p165 = scmp.le.s32.totalorder 1, %s17
      %p166 = scmp.lt.s32.totalorder %s17, 3
      %p167 = pnand %p165, %p166
      %p168 = pneg %p167
      // Predicated region
      $region29: #{_conv_forward.1} parent=5 // pred_check
        _
      $region30: #{_conv_forward.1} parent=5 // pred_check_branch
        %170 = sbr.rel (%p167) target = $region32
      $region31: #{_conv_forward.1} parent=5 // pred_region
        %s171 = ssub.s32 %s17, 1
        // Predicated region
        $region33: #{_conv_forward.1} parent=31 // pred_check
          %p172 = pneg %p38
        $region34: #{_conv_forward.1} parent=31 // pred_check_branch
          %174 = sbr.rel (%p172) target = $region36
        $region35: #{_conv_forward.1} parent=31 // pred_region
          %176 = dma.done [#allocation6], 16
        $region36: #{_conv_forward.1} parent=31 // pred_fallthru
          _
        %s177 = sand.u32 %s72, 1
        %s178 = scalar_lea.sflag [#allocation4], %s177
        %s179 = sand.u32 %s72, 1
        %s180 = smul.addr %s179, 64
        %s181 = scalar_lea.vmem [#allocation7], %s180
        // Predicated region
        $region37: #{_conv_forward.1} parent=31 // pred_check
          %p182 = pneg %p85
        $region38: #{_conv_forward.1} parent=31 // pred_check_branch
          %184 = sbr.rel (%p182) target = $region40
        $region39: #{_conv_forward.1} parent=31 // pred_region
          %186 = dma.done %s178, 1024
        $region40: #{_conv_forward.1} parent=31 // pred_fallthru
          _
        %187 = sfence
        %p188 = pneg %p38
        %p189 = pneg %p35
        %p190 = pneg %p59
        %p191 = pneg %p56
        %s192 = sand.u32 %s72, 1
        %s193 = scalar_lea.sflag [#allocation4], %s192
        %s194 = sand.u32 %s72, 1
        %s195 = smul.addr %s194, 64
        %s196 = scalar_lea.vmem [#allocation7], %s195
        %p197 = pneg %p85
        %p198 = pneg %p82
        %p199 = pneg %p111
        %p200 = pneg %p108
        %s201 = sand.u32 %s98, 1
        %s202 = scalar_lea.sflag [#allocation5], %s201
        %s203 = sand.u32 %s98, 1
        %s204 = smul.addr %s203, 16
        %s205 = scalar_lea.vmem [#allocation8], %s204
        %v206 = vld [vmem:[%s181] sm:$0xff]
        %v207 = vld [vmem:[%s181 + $0x8] sm:$0xff]
        %v208 = vld [vmem:[%s181 + $0x10] sm:$0xff]
        %v209 = vld [vmem:[%s181 + $0x18] sm:$0xff]
        %v210 = vld [vmem:[%s181 + $0x20] sm:$0xff]
        %v211 = vld [vmem:[%s181 + $0x28] sm:$0xff]
        %v212 = vld [vmem:[%s181 + $0x30] sm:$0xff]
        %v213 = vld [vmem:[%s181 + $0x38] sm:$0xff]
        %s214 = sld [smem:[#allocation3]]
        %v215 = vstv %s214
        %v216 = vmul.f32 %v206, %v215
        %v217 = vmul.f32 %v207, %v215
        %s218 = sld [smem:[#allocation3 + $0x1]]
        %v219 = vstv %s218
        %v220 = vmul.f32 %v208, %v219
        %v221 = vmul.f32 %v209, %v219
        %v222 = vadd.f32 %v216, %v220
        %v223 = vadd.f32 %v217, %v221
        %s224 = sld [smem:[#allocation3 + $0x2]]
        %v225 = vstv %s224
        %v226 = vmul.f32 %v210, %v225
        %v227 = vmul.f32 %v211, %v225
        %v228 = vadd.f32 %v222, %v226
        %v229 = vadd.f32 %v223, %v227
        %s230 = sld [smem:[#allocation3 + $0x3]]
        %v231 = vstv %s230
        %v232 = vmul.f32 %v212, %v231
        %v233 = vmul.f32 %v213, %v231
        %v234 = vadd.f32 %v228, %v232
        %v235 = vadd.f32 %v229, %v233
        %s236 = sld [smem:[#allocation2]]
        %v237 = vstv %s236
        %v238 = vadd.f32 %v234, %v237
        %v239 = vadd.f32 %v235, %v237
        %vm240 = vcmask 130048
        %241 = vst.msk [vmem:[%s205] sm:$0xff] %vm240, %v238
        %242 = vst.msk [vmem:[%s205 + $0x8] sm:$0xff] %vm240, %v239
        %s243 = sand.u32 %s98, 1
        %s244 = scalar_lea.sflag [#allocation5], %s243
        %s245 = sand.u32 %s98, 1
        %s246 = smul.addr %s245, 16
        %s247 = scalar_lea.vmem [#allocation8], %s246
        // Predicated region
        $region41: #{_conv_forward.1} parent=31 // pred_check
          %p248 = pneg %p108
        $region42: #{_conv_forward.1} parent=31 // pred_check_branch
          %250 = sbr.rel (%p248) target = $region44
        $region43: #{_conv_forward.1} parent=31 // pred_region
          %252 = vsyncadd %s244, 0
          %s253 = smul.addr %s22, 2
          %s254 = smul.addr %s253, 8
          %s255 = scalar_lea.hbm %s3, %s254
          %s256 = sshll.u32 %s247, 4
          %s257 = int_to_ptr.vmem [resolvable:$true] %s256
          %s258 = sshll.u32 %s255, 4
          %s259 = int_to_ptr.hbm [resolvable:$true] %s258
          %264 = dma.vmem_to_hbm [thread:$0]  %s257, 256, %s259, %s244, 128, 128, 8
        $region44: #{_conv_forward.1} parent=31 // pred_fallthru
          _
      $region32: #{_conv_forward.1} parent=5 // pred_fallthru
        _
      %p265 = scmp.le.s32.totalorder 2, %s17
      // Predicated region
      $region45: #{_conv_forward.1} parent=5 // pred_check
        %p266 = pneg %p265
      $region46: #{_conv_forward.1} parent=5 // pred_check_branch
        %268 = sbr.rel (%p266) target = $region48
      $region47: #{_conv_forward.1} parent=5 // pred_region
        %s269 = ssub.s32 %s17, 2
        // Predicated region
        $region49: #{_conv_forward.1} parent=47 // pred_check
          %p270 = pneg %p114
        $region50: #{_conv_forward.1} parent=47 // pred_check_branch
          %272 = sbr.rel (%p270) target = $region52
        $region51: #{_conv_forward.1} parent=47 // pred_region
          %s273 = sand.u32 %s99, 1
          %s274 = scalar_lea.sflag [#allocation5], %s273
          %s275 = sand.u32 %s99, 1
          %s276 = smul.addr %s275, 16
          %s277 = scalar_lea.vmem [#allocation8], %s276
          %279 = dma.done %s274, 256
        $region52: #{_conv_forward.1} parent=47 // pred_fallthru
          _
      $region48: #{_conv_forward.1} parent=5 // pred_fallthru
        _
    $region6: #{_conv_forward.1} parent=1 // loop_footer
      %s21 = sadd.s32 1, %s17
    $region7: #{_conv_forward.1} parent=1 // loop_footer_branch
      %16 = sbr.rel target = $region3
    $region8: #{_conv_forward.1} parent=1 // loop_exit
      _
    %280 = vsyncpa [#allocation4], 1
    %s281 = scalar_lea.sflag [#allocation4], 1
    %282 = vsyncpa %s281, 1
    %283 = vsyncpa [#allocation5], 1
    %s284 = scalar_lea.sflag [#allocation5], 1
    %285 = vsyncpa %s284, 1
    %286 = vsyncpa [#allocation6], 1
    %s287 = scalar_lea.sflag [#allocation6], 1
    %288 = vsyncpa %s287, 1

</llo_original>
